<compile_context>
chip_gen: v7x
topology: tpu7x:2x2x1
jax: 0.10.0
libtpu: 0.0.40
codegen_flags: <defaults>
</compile_context>

<pallas_src>
import math
from functools import partial

import jax
import jax.numpy as jnp
from jax.experimental import pallas as pl
from jax.experimental.pallas import tpu as pltpu


def _gelu_exact(h):
    # nn.GELU() default is the exact erf-based formulation (PyTorch parity).
    return 0.5 * h * (1.0 + jax.lax.erf(h * jnp.float32(0.7071067811865476)))


def arg_kernel(x_ref, w1_ref, b1_ref, w2_ref, b2_ref, attn_ref, ffn_ref, acc_ref):
    # x_ref:  (bB, tS, E_f) native-dtype tile of (possibly lane-folded) input
    # w1_ref: (E_f, G)  -- pre-scaled by 1/S and pre-tiled for the lane fold
    # b1_ref: (1, G), w2_ref: (G, 2), b2_ref: (1, 2)
    # attn_ref / ffn_ref: (bB, 1); acc_ref: (bB, E_f) f32 running sequence-sum
    s_idx = pl.program_id(1)

    @pl.when(s_idx == 0)
    def _init():
        acc_ref[...] = jnp.zeros_like(acc_ref)

    # Full-tile sublane reduce (VPU, ~1 vadd per loaded vreg), accumulated in
    # f32 with a single unmasked store -- hides entirely under the tile DMA.
    acc_ref[...] += jnp.sum(x_ref[...], axis=1, dtype=jnp.float32)

    @pl.when(s_idx == pl.num_programs(1) - 1)
    def _finalize():
        # w1 already carries the 1/S scale (and the k-fold tiling), so acc is
        # effectively the sequence mean once pushed through w1.
        avg = acc_ref[...]                                                    # (bB, E_f)
        h = jnp.dot(avg, w1_ref[...], preferred_element_type=jnp.float32) + b1_ref[...]
        h = _gelu_exact(h)
        g = jnp.dot(h, w2_ref[...], preferred_element_type=jnp.float32) + b2_ref[...]
        g = jax.nn.sigmoid(g)
        attn_ref[...] = g[:, 0:1].astype(attn_ref.dtype)
        ffn_ref[...] = g[:, 1:2].astype(ffn_ref.dtype)


def _fold_factor(S, E):
    """Lane-density fold factor: pack k consecutive seq rows into the lane dim."""
    if E % 128 == 0:
        return 1
    k = 128 // math.gcd(E, 128)
    if k > 1 and S % k == 0:
        return k
    return 1


def _pick_batch_tile(B):
    # Output-block second-minor dim must be a multiple of 8 or the full batch.
    if B % 8 == 0:
        # 8-row batch blocks give >=2 "parallel" grid points for B>=16 so both
        # v7x TensorCores stream HBM.
        return 8
    # TODO(synk): for B <= 8 on v7x one TensorCore idles; splitting the sequence
    # across cores with per-core partial sums + a tiny combine would fix it.
    # For B > 8 with B % 8 != 0, padding B to a multiple of 8 costs an extra
    # HBM copy of x, so we keep the full batch as one block (reduce is no
    # longer unrolled per row, so this only shrinks the seq tile a little).
    return B


def _per_buffer_budget():
    """Per x-tile DMA budget, sized for the chip generation (amortize ~0.35us/step)."""
    try:
        cap = int(getattr(pltpu.get_tpu_info(), "vmem_capacity_bytes"))
    except Exception:
        cap = 64 * 1024 * 1024                 # assume the tightest (v7x: 64 MiB / TC)
    if cap <= 64 * 1024 * 1024:
        return 12 * 1024 * 1024                # v7x: 2x12 MiB x-buffers + weights + acc < ~48 MiB
    return 16 * 1024 * 1024                    # v5e / v6e: 128 MiB physical VMEM


def _pick_seq_tiling(S_f, bB, E_f, itemsize, per_buffer_budget):
    """Return (tS, S_padded): seq tile rows and the (possibly padded) seq extent."""
    bytes_per_row = max(1, bB * E_f * itemsize)
    max_rows = max(8, min(32768, per_buffer_budget // bytes_per_row))
    if S_f <= max_rows:
        return S_f, S_f                        # single full tile (full-dim block is always legal)
    # Largest multiple-of-8 tS <= max_rows that divides S_f.
    t = (max_rows // 8) * 8
    while t >= 8:
        if S_f % t == 0:
            return t, S_f
        t -= 8
    # No suitable divisor (e.g. prime S): zero-pad the sequence.  Safe because
    # the kernel accumulates a SUM and the 1/S scale uses the original S.
    tS = (max_rows // 8) * 8
    S_pad = ((S_f + tS - 1) // tS) * tS
    return tS, S_pad


@partial(jax.jit, static_argnames=("per_buffer_budget",))
def adaptive_reasoning_gate(x, w1, b1, w2, b2, per_buffer_budget=None):
    """ARG forward pass. Returns (attn_weight, ffn_weight), each (B, 1, 1)."""
    B, S, E = x.shape
    G = w1.shape[1]
    out_dtype = x.dtype

    # Fold the 1/S mean scale into w1 so the kernel accumulates a plain sum.
    w1_scaled = w1.astype(jnp.float32) * jnp.float32(1.0 / S)

    # Lane-density fold (free row-major reshape of x; w1 tiled to undo it).
    k = _fold_factor(S, E)
    if k > 1:
        x_k = x.reshape(B, S // k, k * E)
        w1_k = jnp.tile(w1_scaled, (k, 1))     # (k*E, G): sum of the k segments == full seq sum
    else:
        x_k, w1_k = x, w1_scaled
    S_f, E_f = x_k.shape[1], x_k.shape[2]

    bB = _pick_batch_tile(B)
    per_buf = per_buffer_budget if per_buffer_budget is not None else _per_buffer_budget()
    tS, S_pad = _pick_seq_tiling(S_f, bB, E_f, x_k.dtype.itemsize, per_buf)
    if S_pad != S_f:
        x_k = jnp.pad(x_k, ((0, 0), (0, S_pad - S_f), (0, 0)))

    grid = (B // bB, S_pad // tS)

    # VMEM accounting: 2x double-buffered x tiles + (double-buffered) weights +
    # f32 accumulator + tiny outputs, with headroom.  Stays under v7x's 64 MiB.
    # (Weights have constant index maps; pipeline_mode=pl.Buffered(1) could
    # reclaim their second buffer, but they are small so default buffering is kept.)
    x_tile_bytes = bB * tS * E_f * x_k.dtype.itemsize
    w_bytes = (E_f * G + G + G * 2 + 2) * 4
    acc_bytes = bB * E_f * 4
    need = 2 * x_tile_bytes + 2 * w_bytes + acc_bytes + 4 * bB * 4
    vmem_limit = int(max(32 * 1024 * 1024, need + 8 * 1024 * 1024))

    attn, ffn = pl.pallas_call(
        arg_kernel,
        out_shape=(jax.ShapeDtypeStruct((B, 1), out_dtype),
                   jax.ShapeDtypeStruct((B, 1), out_dtype)),
        grid_spec=pltpu.PrefetchScalarGridSpec(
            num_scalar_prefetch=0,
            grid=grid,
            in_specs=[
                pl.BlockSpec((bB, tS, E_f), lambda b, s: (b, s, 0)),   # x tiles (pipelined)
                pl.BlockSpec((E_f, G), lambda b, s: (0, 0)),           # w1 (constant index)
                pl.BlockSpec((1, G), lambda b, s: (0, 0)),             # b1
                pl.BlockSpec((G, 2), lambda b, s: (0, 0)),             # w2
                pl.BlockSpec((1, 2), lambda b, s: (0, 0)),             # b2
            ],
            out_specs=(
                pl.BlockSpec((bB, 1), lambda b, s: (b, 0)),            # attn gate
                pl.BlockSpec((bB, 1), lambda b, s: (b, 0)),            # ffn gate
            ),
            scratch_shapes=[pltpu.VMEM((bB, E_f), jnp.float32)],
        ),
        compiler_params=pltpu.CompilerParams(
            dimension_semantics=("parallel", "arbitrary"),
            vmem_limit_bytes=vmem_limit,
        ),
    )(
        x_k,
        w1_k,
        b1.reshape(1, G).astype(jnp.float32),
        w2.astype(jnp.float32),
        b2.reshape(1, 2).astype(jnp.float32),
    )

    # (B,1) -> (B,1,1) is a free metadata reshape (no extra slice/shuffle ops).
    return attn.reshape(B, 1, 1), ffn.reshape(B, 1, 1)


def init_params(key, embed_dim, gate_dim=128):
    """Deterministic synthetic parameter init (shapes match the nn.Linear layers)."""
    k1, k2, k3, k4 = jax.random.split(key, 4)
    s1 = 1.0 / jnp.sqrt(embed_dim)
    s2 = 1.0 / jnp.sqrt(gate_dim)
    w1 = jax.random.uniform(k1, (embed_dim, gate_dim), jnp.float32, -s1, s1)
    b1 = jax.random.uniform(k2, (gate_dim,), jnp.float32, -s1, s1)
    w2 = jax.random.uniform(k3, (gate_dim, 2), jnp.float32, -s2, s2)
    b2 = jax.random.uniform(k4, (2,), jnp.float32, -s2, s2)
    return w1, b1, w2, b2


def _reference(x, w1, b1, w2, b2):
    avg = x.mean(axis=1)
    h = avg @ w1 + b1
    h = 0.5 * h * (1.0 + jax.lax.erf(h / jnp.sqrt(2.0)))
    g = jax.nn.sigmoid(h @ w2 + b2)
    return g[:, 0][:, None, None], g[:, 1][:, None, None]


if __name__ == "__main__":
    key = jax.random.PRNGKey(0)

    # Case 1: module's nominal small shape (E=32 exercises the lane fold).
    kx, kp = jax.random.split(key)
    batch, seq, embed_dim, gate_dim = 2, 8, 32, 128
    x = jax.random.normal(kx, (batch, seq, embed_dim), jnp.float32)
    w1, b1, w2, b2 = init_params(kp, embed_dim, gate_dim)
    attn_w, ffn_w = adaptive_reasoning_gate(x, w1, b1, w2, b2)
    jax.block_until_ready((attn_w, ffn_w))
    ref_attn, ref_ffn = _reference(x, w1, b1, w2, b2)
    assert attn_w.shape == (batch, 1, 1) and ffn_w.shape == (batch, 1, 1)
    assert jnp.allclose(attn_w, ref_attn, atol=1e-5)
    assert jnp.allclose(ffn_w, ref_ffn, atol=1e-5)

    # Case 2: multi-step sequence accumulation + bB=8 path (tiny forced budget).
    kx2, kp2 = jax.random.split(jax.random.PRNGKey(1))
    batch2, seq2, embed2 = 8, 64, 32
    x2 = jax.random.normal(kx2, (batch2, seq2, embed2), jnp.float32)
    p2 = init_params(kp2, embed2, gate_dim)
    a2, f2 = adaptive_reasoning_gate(x2, *p2, per_buffer_budget=4096)
    jax.block_until_ready((a2, f2))
    ra2, rf2 = _reference(x2, *p2)
    assert jnp.allclose(a2, ra2, atol=1e-5) and jnp.allclose(f2, rf2, atol=1e-5)

    # Case 3: lane-aligned embed (no fold) path.
    kx3, kp3 = jax.random.split(jax.random.PRNGKey(2))
    batch3, seq3, embed3 = 2, 8, 128
    x3 = jax.random.normal(kx3, (batch3, seq3, embed3), jnp.float32)
    p3 = init_params(kp3, embed3, gate_dim)
    a3, f3 = adaptive_reasoning_gate(x3, *p3)
    jax.block_until_ready((a3, f3))
    ra3, rf3 = _reference(x3, *p3)
    assert jnp.allclose(a3, ra3, atol=1e-5) and jnp.allclose(f3, rf3, atol=1e-5)

    print("KERNEL_OK")
</pallas_src>

<mosaic_0001>
module attributes {stable_mosaic.version = 11 : i64} {
  func.func @arg_kernel(%arg0: i32, %arg1: i32, %arg2: memref<2x2x128xf32, #tpu.memory_space<vmem>>, %arg3: memref<128x128xf32, #tpu.memory_space<vmem>>, %arg4: memref<1x128xf32, #tpu.memory_space<vmem>>, %arg5: memref<128x2xf32, #tpu.memory_space<vmem>>, %arg6: memref<1x2xf32, #tpu.memory_space<vmem>>, %arg7: memref<2x1xf32, #tpu.memory_space<vmem>>, %arg8: memref<2x1xf32, #tpu.memory_space<vmem>>, %arg9: memref<2x128xf32, #tpu.memory_space<vmem>>) attributes {dimension_semantics = [#tpu.dimension_semantics<parallel>, #tpu.dimension_semantics<arbitrary>], iteration_bounds = array<i64: 1, 1>, scalar_prefetch = 0 : i64, scratch_operands = 1 : i64, tpu.core_type = #tpu.core_type<tc>, window_params = [{transform_indices = @transform_0, window_bounds = array<i64: 2, 2, 128>}, {pipeline_mode = #tpu.pipeline_mode<synchronous>, transform_indices = @transform_1, window_bounds = array<i64: 128, 128>}, {pipeline_mode = #tpu.pipeline_mode<synchronous>, transform_indices = @transform_2, window_bounds = array<i64: 1, 128>}, {pipeline_mode = #tpu.pipeline_mode<synchronous>, transform_indices = @transform_3, window_bounds = array<i64: 128, 2>}, {pipeline_mode = #tpu.pipeline_mode<synchronous>, transform_indices = @transform_4, window_bounds = array<i64: 1, 2>}, {transform_indices = @transform_5, window_bounds = array<i64: 2, 1>}, {transform_indices = @transform_6, window_bounds = array<i64: 2, 1>}]} {
    %c0_i32 = arith.constant 0 : i32
    %0 = arith.cmpi eq, %arg1, %c0_i32 : i32
    %1 = arith.extui %0 : i1 to i32
    %c0_i32_0 = arith.constant 0 : i32
    %2 = arith.cmpi ne, %1, %c0_i32_0 : i32
    scf.if %2 {
      %cst_9 = arith.constant 0.000000e+00 : f32
      %11 = vector.broadcast %cst_9 : f32 to vector<2x128xf32>
      %c0_10 = arith.constant 0 : index
      %c0_11 = arith.constant 0 : index
      %12 = vector.load %arg9[%c0_10, %c0_11] : memref<2x128xf32, #tpu.memory_space<vmem>>, vector<2x128xf32>
      tpu.vector_store %arg9[%c0_10, %c0_11], %11 {strides = array<i32>} : memref<2x128xf32, #tpu.memory_space<vmem>>, vector<2x128xf32>,
    } else {
    }
    %c0 = arith.constant 0 : index
    %c0_1 = arith.constant 0 : index
    %3 = vector.load %arg9[%c0, %c0_1] : memref<2x128xf32, #tpu.memory_space<vmem>>, vector<2x128xf32>
    %c0_2 = arith.constant 0 : index
    %c0_3 = arith.constant 0 : index
    %c0_4 = arith.constant 0 : index
    %4 = vector.load %arg2[%c0_2, %c0_3, %c0_4] : memref<2x2x128xf32, #tpu.memory_space<vmem>>, vector<2x2x128xf32>
    %cst = arith.constant dense<0.000000e+00> : vector<2x128xf32>
    %5 = vector.multi_reduction <add>, %4, %cst [1] : vector<2x2x128xf32> to vector<2x128xf32>
    %6 = arith.addf %3, %5 : vector<2x128xf32>
    %c0_5 = arith.constant 0 : index
    %c0_6 = arith.constant 0 : index
    %7 = vector.load %arg9[%c0_5, %c0_6] : memref<2x128xf32, #tpu.memory_space<vmem>>, vector<2x128xf32>
    tpu.vector_store %arg9[%c0_5, %c0_6], %6 {strides = array<i32>} : memref<2x128xf32, #tpu.memory_space<vmem>>, vector<2x128xf32>,
    %c0_i32_7 = arith.constant 0 : i32
    %8 = arith.cmpi eq, %arg1, %c0_i32_7 : i32
    %9 = arith.extui %8 : i1 to i32
    %c0_i32_8 = arith.constant 0 : i32
    %10 = arith.cmpi ne, %9, %c0_i32_8 : i32
    scf.if %10 {
      %c0_9 = arith.constant 0 : index
      %c0_10 = arith.constant 0 : index
      %11 = vector.load %arg9[%c0_9, %c0_10] : memref<2x128xf32, #tpu.memory_space<vmem>>, vector<2x128xf32>
      %c0_11 = arith.constant 0 : index
      %c0_12 = arith.constant 0 : index
      %12 = vector.load %arg3[%c0_11, %c0_12] : memref<128x128xf32, #tpu.memory_space<vmem>>, vector<128x128xf32>
      %cst_13 = arith.constant dense<0.000000e+00> : vector<2x128xf32>
      %13 = tpu.matmul %11, %12, %cst_13 {dimension_numbers = #tpu.dot_dimension_numbers<[1], [0], [0], [1], [0, 0, 1, 1], [], []>} : vector<2x128xf32>, vector<128x128xf32>, vector<2x128xf32> -> vector<2x128xf32>
      %c0_14 = arith.constant 0 : index
      %c0_15 = arith.constant 0 : index
      %14 = vector.load %arg4[%c0_14, %c0_15] : memref<1x128xf32, #tpu.memory_space<vmem>>, vector<1x128xf32>
      %15 = vector.broadcast %14 : vector<1x128xf32> to vector<2x128xf32>
      %16 = arith.addf %13, %15 : vector<2x128xf32>
      %cst_16 = arith.constant 5.000000e-01 : f32
      %17 = vector.broadcast %cst_16 : f32 to vector<2x128xf32>
      %18 = arith.mulf %17, %16 : vector<2x128xf32>
      %cst_17 = arith.constant 0.707106769 : f32
      %19 = vector.broadcast %cst_17 : f32 to vector<2x128xf32>
      %20 = arith.mulf %16, %19 : vector<2x128xf32>
      %21 = math.erf %20 : vector<2x128xf32>
      %cst_18 = arith.constant 1.000000e+00 : f32
      %22 = vector.broadcast %cst_18 : f32 to vector<2x128xf32>
      %23 = arith.addf %22, %21 : vector<2x128xf32>
      %24 = arith.mulf %18, %23 : vector<2x128xf32>
      %c0_19 = arith.constant 0 : index
      %c0_20 = arith.constant 0 : index
      %25 = vector.load %arg5[%c0_19, %c0_20] : memref<128x2xf32, #tpu.memory_space<vmem>>, vector<128x2xf32>
      %cst_21 = arith.constant dense<0.000000e+00> : vector<2x2xf32>
      %26 = tpu.matmul %24, %25, %cst_21 {dimension_numbers = #tpu.dot_dimension_numbers<[1], [0], [0], [1], [0, 0, 1, 1], [], []>} : vector<2x128xf32>, vector<128x2xf32>, vector<2x2xf32> -> vector<2x2xf32>
      %c0_22 = arith.constant 0 : index
      %c0_23 = arith.constant 0 : index
      %27 = vector.load %arg6[%c0_22, %c0_23] : memref<1x2xf32, #tpu.memory_space<vmem>>, vector<1x2xf32>
      %28 = vector.broadcast %27 : vector<1x2xf32> to vector<2x2xf32>
      %29 = arith.addf %26, %28 : vector<2x2xf32>
      %30 = arith.negf %29 : vector<2x2xf32>
      %31 = math.exp %30 : vector<2x2xf32>
      %cst_24 = arith.constant 1.000000e+00 : f32
      %32 = vector.broadcast %cst_24 : f32 to vector<2x2xf32>
      %33 = arith.addf %32, %31 : vector<2x2xf32>
      %34 = arith.divf %32, %33 : vector<2x2xf32>
      %35 = vector.extract_strided_slice %34 {offsets = [0, 0], sizes = [2, 1], strides = [1, 1]} : vector<2x2xf32> to vector<2x1xf32>
      %c0_25 = arith.constant 0 : index
      %c0_26 = arith.constant 0 : index
      %36 = vector.load %arg7[%c0_25, %c0_26] : memref<2x1xf32, #tpu.memory_space<vmem>>, vector<2x1xf32>
      tpu.vector_store %arg7[%c0_25, %c0_26], %35 {strides = array<i32>} : memref<2x1xf32, #tpu.memory_space<vmem>>, vector<2x1xf32>,
      %37 = vector.extract_strided_slice %34 {offsets = [0, 1], sizes = [2, 1], strides = [1, 1]} : vector<2x2xf32> to vector<2x1xf32>
      %c0_27 = arith.constant 0 : index
      %c0_28 = arith.constant 0 : index
      %38 = vector.load %arg8[%c0_27, %c0_28] : memref<2x1xf32, #tpu.memory_space<vmem>>, vector<2x1xf32>
      tpu.vector_store %arg8[%c0_27, %c0_28], %37 {strides = array<i32>} : memref<2x1xf32, #tpu.memory_space<vmem>>, vector<2x1xf32>,
    } else {
    }
    return
  }
  func.func @transform_0(%arg0: i32, %arg1: i32) -> (i32, i32, i32) {
    %c0_i32 = arith.constant 0 : i32
    %c0_i32_0 = arith.constant 0 : i32
    return %arg0, %arg1, %c0_i32 : i32, i32, i32
  }
  func.func @transform_1(%arg0: i32, %arg1: i32) -> (i32, i32) {
    %c0_i32 = arith.constant 0 : i32
    %c0_i32_0 = arith.constant 0 : i32
    %c0_i32_1 = arith.constant 0 : i32
    return %c0_i32, %c0_i32_0 : i32, i32
  }
  func.func @transform_2(%arg0: i32, %arg1: i32) -> (i32, i32) {
    %c0_i32 = arith.constant 0 : i32
    %c0_i32_0 = arith.constant 0 : i32
    %c0_i32_1 = arith.constant 0 : i32
    return %c0_i32, %c0_i32_0 : i32, i32
  }
  func.func @transform_3(%arg0: i32, %arg1: i32) -> (i32, i32) {
    %c0_i32 = arith.constant 0 : i32
    %c0_i32_0 = arith.constant 0 : i32
    %c0_i32_1 = arith.constant 0 : i32
    return %c0_i32, %c0_i32_0 : i32, i32
  }
  func.func @transform_4(%arg0: i32, %arg1: i32) -> (i32, i32) {
    %c0_i32 = arith.constant 0 : i32
    %c0_i32_0 = arith.constant 0 : i32
    %c0_i32_1 = arith.constant 0 : i32
    return %c0_i32, %c0_i32_0 : i32, i32
  }
  func.func @transform_5(%arg0: i32, %arg1: i32) -> (i32, i32) {
    %c0_i32 = arith.constant 0 : i32
    %c0_i32_0 = arith.constant 0 : i32
    return %arg0, %c0_i32 : i32, i32
  }
  func.func @transform_6(%arg0: i32, %arg1: i32) -> (i32, i32) {
    %c0_i32 = arith.constant 0 : i32
    %c0_i32_0 = arith.constant 0 : i32
    return %arg0, %c0_i32 : i32, i32
  }
}

</mosaic_0001>

<llo_original>
// kernel: adaptive_reasoning_gate.1
$region0: #{adaptive_reasoning_gate.1}
  #allocation0 [shape = 'u32[]', space=smem, size = 0x4, offset = 0x4, fixed_abs, tag = 'smem constant byte address 0x4 - core index']
  #allocation1 [shape = 'u32[144,128]{1,0:T(1,128)}', space=vmem, size = 0x12000, scoped, tag = 'internal scratch']
  #allocation2 [shape = 'f32[2,128]{1,0:T(2,128)}', space=vmem, size = 0x400, scoped, tag = 'scratch operand']
  %s0 = inlined_call_operand.vmem [shape: f32[2,2,128], index: 0, kind: input, shape index: {}]
  %s1 = inlined_call_operand.vmem [shape: f32[128,128], index: 1, kind: input, shape index: {}]
  %s2 = inlined_call_operand.vmem [shape: f32[1,128], index: 2, kind: input, shape index: {}]
  %s3 = inlined_call_operand.vmem [shape: f32[128,2], index: 3, kind: input, shape index: {}]
  %s4 = inlined_call_operand.vmem [shape: f32[1,2], index: 4, kind: input, shape index: {}]
  %s5 = inlined_call_operand.vmem [shape: f32[2,1], index: 5, kind: output, shape index: {0}]
  %s6 = inlined_call_operand.vmem [shape: f32[2,1], index: 6, kind: output, shape index: {1}]
  %7 = xla_tuple %s5, %s6
  %s8 = sld [smem:[#allocation0]]
  $region46: #{adaptive_reasoning_gate.1} parent=0
    _
  %s10 = ssub.s32 1, %s8
  %s11 = scalar_select 0, %s10, %s8
  // Predicated region
  $region2: #{adaptive_reasoning_gate.1} parent=0 // pred_check
    _
  $region3: #{adaptive_reasoning_gate.1} parent=0 // pred_check_branch
    %13 = sbr.rel (0) target = $region5
  $region4: #{adaptive_reasoning_gate.1} parent=0 // pred_region
    _
  $region5: #{adaptive_reasoning_gate.1} parent=0 // pred_fallthru
    _
  // Predicated region
  $region6: #{adaptive_reasoning_gate.1} parent=0 // pred_check
    _
  $region7: #{adaptive_reasoning_gate.1} parent=0 // pred_check_branch
    %15 = sbr.rel (0) target = $region9
  $region8: #{adaptive_reasoning_gate.1} parent=0 // pred_region
    _
  $region9: #{adaptive_reasoning_gate.1} parent=0 // pred_fallthru
    _
  // Predicated region
  $region10: #{adaptive_reasoning_gate.1} parent=0 // pred_check
    _
  $region11: #{adaptive_reasoning_gate.1} parent=0 // pred_check_branch
    %17 = sbr.rel (0) target = $region13
  $region12: #{adaptive_reasoning_gate.1} parent=0 // pred_region
    _
  $region13: #{adaptive_reasoning_gate.1} parent=0 // pred_fallthru
    _
  // Predicated region
  $region14: #{adaptive_reasoning_gate.1} parent=0 // pred_check
    _
  $region15: #{adaptive_reasoning_gate.1} parent=0 // pred_check_branch
    %19 = sbr.rel (0) target = $region17
  $region16: #{adaptive_reasoning_gate.1} parent=0 // pred_region
    _
  $region17: #{adaptive_reasoning_gate.1} parent=0 // pred_fallthru
    _
  // Predicated region
  $region18: #{adaptive_reasoning_gate.1} parent=0 // pred_check
    _
  $region19: #{adaptive_reasoning_gate.1} parent=0 // pred_check_branch
    %21 = sbr.rel (0) target = $region21
  $region20: #{adaptive_reasoning_gate.1} parent=0 // pred_region
    _
  $region21: #{adaptive_reasoning_gate.1} parent=0 // pred_fallthru
    _
  %p22 = scmp.eq.s32.totalorder 0, 0
  // Predicated region
  $region22: #{adaptive_reasoning_gate.1} parent=0 // pred_check
    %p23 = pneg %p22
  $region23: #{adaptive_reasoning_gate.1} parent=0 // pred_check_branch
    %25 = sbr.rel (%p23) target = $region25
  $region24: #{adaptive_reasoning_gate.1} parent=0 // pred_region
    %26 = vst [vmem:[#allocation2] sm:$0x3] 0.0
  $region25: #{adaptive_reasoning_gate.1} parent=0 // pred_fallthru
    _
  %v27 = vld [vmem:[#allocation2] sm:$0x3]
  %v28 = vld [vmem:[%s0] sm:$0x3]
  %v29 = vld [vmem:[%s0 + $0x2] sm:$0x3]
  %vm30 = vcmask 1041408
  %v31 = vsel %vm30, %v28, 0.0
  %v32 = vrot.slane %v31, 4
  %v33 = vadd.f32 %v31, %v32
  %v34 = vrot.slane %v33, 2
  %v35 = vadd.f32 %v33, %v34
  %v36 = vrot.slane %v35, 1
  %v37 = vadd.f32 %v35, %v36
  %v38 = vsel %vm30, %v29, 0.0
  %v39 = vrot.slane %v38, 4
  %v40 = vadd.f32 %v38, %v39
  %v41 = vrot.slane %v40, 2
  %v42 = vadd.f32 %v40, %v41
  %v43 = vrot.slane %v42, 1
  %v44 = vadd.f32 %v42, %v43
  %vm47 = vcmask 1041409
  %v48 = vsel %vm47, %v44, %v37
  %v50 = vadd.f32 %v27, %v48
  %51 = vst [vmem:[#allocation2] sm:$0x3] %v50
  // Predicated region
  $region26: #{adaptive_reasoning_gate.1} parent=0 // pred_check
    %p52 = pneg %p22
  $region27: #{adaptive_reasoning_gate.1} parent=0 // pred_check_branch
    %54 = sbr.rel (%p52) target = $region29
  $region28: #{adaptive_reasoning_gate.1} parent=0 // pred_region
    %v55 = vld [vmem:[#allocation2] sm:$0x3]
    %v56 = vld [vmem:[%s1] sm:$0xff]
    %v57 = vld [vmem:[%s1 + $0x8] sm:$0xff]
    %v58 = vld [vmem:[%s1 + $0x10] sm:$0xff]
    %v59 = vld [vmem:[%s1 + $0x18] sm:$0xff]
    %v60 = vld [vmem:[%s1 + $0x20] sm:$0xff]
    %v61 = vld [vmem:[%s1 + $0x28] sm:$0xff]
    %v62 = vld [vmem:[%s1 + $0x30] sm:$0xff]
    %v63 = vld [vmem:[%s1 + $0x38] sm:$0xff]
    %v64 = vld [vmem:[%s1 + $0x40] sm:$0xff]
    %v65 = vld [vmem:[%s1 + $0x48] sm:$0xff]
    %v66 = vld [vmem:[%s1 + $0x50] sm:$0xff]
    %v67 = vld [vmem:[%s1 + $0x58] sm:$0xff]
    %v68 = vld [vmem:[%s1 + $0x60] sm:$0xff]
    %v69 = vld [vmem:[%s1 + $0x68] sm:$0xff]
    %v70 = vld [vmem:[%s1 + $0x70] sm:$0xff]
    %v71 = vld [vmem:[%s1 + $0x78] sm:$0xff]
    %v72 = vld [vmem:[%s2] sm:$0x1]
    %v74 = vlaneseq
    %v75 = vshrl.u32 %v74, 7
    %v76 = vsub.s32 0, %v75
    %v77 = vrot.slane %v72, %v76
    %79 = vmatprep.subr.mxu0 0.0
    %80 = vmatpush1.msra.mxu0 %v56
    %81 = vmatprep.subr.mxu0 0.0
    %82 = vmatpush1.msra.mxu0 %v57
    %83 = vmatprep.subr.mxu0 0.0
    %84 = vmatpush1.msra.mxu0 %v58
    %85 = vmatprep.subr.mxu0 0.0
    %86 = vmatpush1.msra.mxu0 %v59
    %87 = vmatprep.subr.mxu0 0.0
    %88 = vmatpush1.msra.mxu0 %v60
    %89 = vmatprep.subr.mxu0 0.0
    %90 = vmatpush1.msra.mxu0 %v61
    %91 = vmatprep.subr.mxu0 0.0
    %92 = vmatpush1.msra.mxu0 %v62
    %93 = vmatprep.subr.mxu0 0.0
    %94 = vmatpush1.msra.mxu0 %v63
    %95 = vmatprep.subr.mxu0 0.0
    %96 = vmatpush1.msra.mxu0 %v64
    %97 = vmatprep.subr.mxu0 0.0
    %98 = vmatpush1.msra.mxu0 %v65
    %99 = vmatprep.subr.mxu0 0.0
    %100 = vmatpush1.msra.mxu0 %v66
    %101 = vmatprep.subr.mxu0 0.0
    %102 = vmatpush1.msra.mxu0 %v67
    %103 = vmatprep.subr.mxu0 0.0
    %104 = vmatpush1.msra.mxu0 %v68
    %105 = vmatprep.subr.mxu0 0.0
    %106 = vmatpush1.msra.mxu0 %v69
    %107 = vmatprep.subr.mxu0 0.0
    %108 = vmatpush1.msra.mxu0 %v70
    %109 = vmatprep.subr.mxu0 0.0
    %110 = vmatpush1.msra.mxu0 %v71
    %111 = vmatprep.subr.mxu0 0.0
    %112 = vmatpush1.msra.mxu0 0.0
    %113 = vmatprep.subr.mxu0 0.0
    %114 = vmatpush1.msra.mxu0 0.0
    %115 = vmatprep.subr.mxu0 0.0
    %116 = vmatpush1.msra.mxu0 0.0
    %117 = vmatprep.subr.mxu0 0.0
    %118 = vmatpush1.msra.mxu0 0.0
    %119 = vmatprep.subr.mxu0 0.0
    %120 = vmatpush1.msra.mxu0 0.0
    %121 = vmatprep.subr.mxu0 0.0
    %122 = vmatpush1.msra.mxu0 0.0
    %123 = vmatprep.subr.mxu0 0.0
    %124 = vmatpush1.msra.mxu0 0.0
    %125 = vmatprep.subr.mxu0 0.0
    %126 = vmatpush1.msra.mxu0 0.0
    %127 = vmatprep.subr.mxu0 0.0
    %128 = vmatpush1.msra.mxu0 0.0
    %129 = vmatprep.subr.mxu0 0.0
    %130 = vmatpush1.msra.mxu0 0.0
    %131 = vmatprep.subr.mxu0 0.0
    %132 = vmatpush1.msra.mxu0 0.0
    %133 = vmatprep.subr.mxu0 0.0
    %134 = vmatpush1.msra.mxu0 0.0
    %135 = vmatprep.subr.mxu0 0.0
    %136 = vmatpush1.msra.mxu0 0.0
    %137 = vmatprep.subr.mxu0 0.0
    %138 = vmatpush1.msra.mxu0 0.0
    %139 = vmatprep.subr.mxu0 0.0
    %140 = vmatpush1.msra.mxu0 0.0
    %141 = vmatprep.subr.mxu0 0.0
    %142 = vmatpush1.msra.mxu0 0.0
    %143 = vmatprep.mubr.f32.mxu0 0.0
    %144 = vmatmul.mubr.f32.gmra.mrb[0].mxu0 %v55
    %v145 = vpop.f32.mrb[0].mxu0
    %v146 = vadd.f32 %v77, %v145
    %v147 = vpop.f32.mrb[0].mxu0
    %148 = vdwg.mxu0
    %v149 = vmul.f32 %v146, 0.5
    %v150 = vmul.f32 %v146, 0.70710677
    %v151 = verf.f32.pop %v150
    %v152 = vadd.f32 %v151, 1.0
    %v153 = vmul.f32 %v149, %v152
    %v154 = vld [vmem:[%s3] sm:$0xff]
    %v155 = vld [vmem:[%s3 + $0x8] sm:$0xff]
    %v156 = vld [vmem:[%s3 + $0x10] sm:$0xff]
    %v157 = vld [vmem:[%s3 + $0x18] sm:$0xff]
    %v158 = vld [vmem:[%s3 + $0x20] sm:$0xff]
    %v159 = vld [vmem:[%s3 + $0x28] sm:$0xff]
    %v160 = vld [vmem:[%s3 + $0x30] sm:$0xff]
    %v161 = vld [vmem:[%s3 + $0x38] sm:$0xff]
    %v162 = vld [vmem:[%s3 + $0x40] sm:$0xff]
    %v163 = vld [vmem:[%s3 + $0x48] sm:$0xff]
    %v164 = vld [vmem:[%s3 + $0x50] sm:$0xff]
    %v165 = vld [vmem:[%s3 + $0x58] sm:$0xff]
    %v166 = vld [vmem:[%s3 + $0x60] sm:$0xff]
    %v167 = vld [vmem:[%s3 + $0x68] sm:$0xff]
    %v168 = vld [vmem:[%s3 + $0x70] sm:$0xff]
    %v169 = vld [vmem:[%s3 + $0x78] sm:$0xff]
    %v170 = vld [vmem:[%s4] sm:$0x1]
    %v172 = vlaneseq
    %v173 = vshrl.u32 %v172, 7
    %v174 = vsub.s32 0, %v173
    %v175 = vrot.slane %v170, %v174
    %177 = vmatprep.subr.mxu0 0.0
    %178 = vmatpush1.msra.mxu0 %v154
    %179 = vmatprep.subr.mxu0 0.0
    %180 = vmatpush1.msra.mxu0 %v155
    %181 = vmatprep.subr.mxu0 0.0
    %182 = vmatpush1.msra.mxu0 %v156
    %183 = vmatprep.subr.mxu0 0.0
    %184 = vmatpush1.msra.mxu0 %v157
    %185 = vmatprep.subr.mxu0 0.0
    %186 = vmatpush1.msra.mxu0 %v158
    %187 = vmatprep.subr.mxu0 0.0
    %188 = vmatpush1.msra.mxu0 %v159
    %189 = vmatprep.subr.mxu0 0.0
    %190 = vmatpush1.msra.mxu0 %v160
    %191 = vmatprep.subr.mxu0 0.0
    %192 = vmatpush1.msra.mxu0 %v161
    %193 = vmatprep.subr.mxu0 0.0
    %194 = vmatpush1.msra.mxu0 %v162
    %195 = vmatprep.subr.mxu0 0.0
    %196 = vmatpush1.msra.mxu0 %v163
    %197 = vmatprep.subr.mxu0 0.0
    %198 = vmatpush1.msra.mxu0 %v164
    %199 = vmatprep.subr.mxu0 0.0
    %200 = vmatpush1.msra.mxu0 %v165
    %201 = vmatprep.subr.mxu0 0.0
    %202 = vmatpush1.msra.mxu0 %v166
    %203 = vmatprep.subr.mxu0 0.0
    %204 = vmatpush1.msra.mxu0 %v167
    %205 = vmatprep.subr.mxu0 0.0
    %206 = vmatpush1.msra.mxu0 %v168
    %207 = vmatprep.subr.mxu0 0.0
    %208 = vmatpush1.msra.mxu0 %v169
    %209 = vmatprep.subr.mxu0 0.0
    %210 = vmatpush1.msra.mxu0 0.0
    %211 = vmatprep.subr.mxu0 0.0
    %212 = vmatpush1.msra.mxu0 0.0
    %213 = vmatprep.subr.mxu0 0.0
    %214 = vmatpush1.msra.mxu0 0.0
    %215 = vmatprep.subr.mxu0 0.0
    %216 = vmatpush1.msra.mxu0 0.0
    %217 = vmatprep.subr.mxu0 0.0
    %218 = vmatpush1.msra.mxu0 0.0
    %219 = vmatprep.subr.mxu0 0.0
    %220 = vmatpush1.msra.mxu0 0.0
    %221 = vmatprep.subr.mxu0 0.0
    %222 = vmatpush1.msra.mxu0 0.0
    %223 = vmatprep.subr.mxu0 0.0
    %224 = vmatpush1.msra.mxu0 0.0
    %225 = vmatprep.subr.mxu0 0.0
    %226 = vmatpush1.msra.mxu0 0.0
    %227 = vmatprep.subr.mxu0 0.0
    %228 = vmatpush1.msra.mxu0 0.0
    %229 = vmatprep.subr.mxu0 0.0
    %230 = vmatpush1.msra.mxu0 0.0
    %231 = vmatprep.subr.mxu0 0.0
    %232 = vmatpush1.msra.mxu0 0.0
    %233 = vmatprep.subr.mxu0 0.0
    %234 = vmatpush1.msra.mxu0 0.0
    %235 = vmatprep.subr.mxu0 0.0
    %236 = vmatpush1.msra.mxu0 0.0
    %237 = vmatprep.subr.mxu0 0.0
    %238 = vmatpush1.msra.mxu0 0.0
    %239 = vmatprep.subr.mxu0 0.0
    %240 = vmatpush1.msra.mxu0 0.0
    %241 = vmatprep.mubr.f32.mxu0 0.0
    %242 = vmatmul.mubr.f32.gmra.mrb[0].mxu0 %v153
    %v243 = vpop.f32.mrb[0].mxu0
    %v244 = vadd.f32 %v175, %v243
    %v245 = vpop.f32.mrb[0].mxu0
    %246 = vdwg.mxu0
    %v247 = vxor.u32 %v244, 2147483648
    %v248 = vmul.f32 %v247, 1.442695
    %v249 = vpow.pop %v248
    %v250 = vadd.f32 %v249, 1.0
    %v251 = vrcp.pop %v250
    %v252 = vmul.f32 1.0, %v251
    %vm253 = vcmask 1024
    %254 = vst.msk [vmem:[%s5] sm:$0x3] %vm253, %v252
    %256 = vrot.lane.b32.xlu0 %v252, 127
    %v257 = vpop.permute.xlu0 %256
    %259 = vst.msk [vmem:[%s6] sm:$0x3] %vm253, %v257
  $region29: #{adaptive_reasoning_gate.1} parent=0 // pred_fallthru
    _
  // Predicated region
  $region30: #{adaptive_reasoning_gate.1} parent=0 // pred_check
    _
  $region31: #{adaptive_reasoning_gate.1} parent=0 // pred_check_branch
    %261 = sbr.rel (0) target = $region33
  $region32: #{adaptive_reasoning_gate.1} parent=0 // pred_region
    _
  $region33: #{adaptive_reasoning_gate.1} parent=0 // pred_fallthru
    _
  // Predicated region
  $region34: #{adaptive_reasoning_gate.1} parent=0 // pred_check
    _
  $region35: #{adaptive_reasoning_gate.1} parent=0 // pred_check_branch
    %263 = sbr.rel (0) target = $region37
  $region36: #{adaptive_reasoning_gate.1} parent=0 // pred_region
    _
  $region37: #{adaptive_reasoning_gate.1} parent=0 // pred_fallthru
    _
  // Predicated region
  $region38: #{adaptive_reasoning_gate.1} parent=0 // pred_check
    _
  $region39: #{adaptive_reasoning_gate.1} parent=0 // pred_check_branch
    %265 = sbr.rel (0) target = $region41
  $region40: #{adaptive_reasoning_gate.1} parent=0 // pred_region
    _
  $region41: #{adaptive_reasoning_gate.1} parent=0 // pred_fallthru
    _
  // Predicated region
  $region42: #{adaptive_reasoning_gate.1} parent=0 // pred_check
    _
  $region43: #{adaptive_reasoning_gate.1} parent=0 // pred_check_branch
    %267 = sbr.rel (0) target = $region45
  $region44: #{adaptive_reasoning_gate.1} parent=0 // pred_region
    _
  $region45: #{adaptive_reasoning_gate.1} parent=0 // pred_fallthru
    _

</llo_original>
